<compile_context>
chip_gen: v6e
topology: v6e:2x2x1
jax: 0.10.0
libtpu: 0.0.40
codegen_flags: <defaults>
</compile_context>

<pallas_src>
import functools

import jax
import jax.numpy as jnp
from jax.experimental import pallas as pl
from jax.experimental.pallas import tpu as pltpu


def _block_mask_kernel(mask_pad_ref, out_ref, *, block_size, H, W):
    """Compute the scaled DropBlock mask from zero-padded Bernoulli seeds.

    mask_pad_ref : (N, H + 2*pad, W + 2*pad) f32  -- 0/1 seeds, zero padded
    out_ref      : (N, H, W) f32  -- (1 - maxpool(seeds)) * numel / sum
    """
    mp = mask_pad_ref[...]                                # (N, Hp, Wp)

    # Separable stride-1 max pool with kernel (block_size, block_size):
    # running max over the W (lane) shifts first, then the H (sublane) shifts.
    rowp = mp[:, :, 0:W]
    for dj in range(1, block_size):
        rowp = jnp.maximum(rowp, mp[:, :, dj:dj + W])
    pooled = rowp[:, 0:H, :]
    for di in range(1, block_size):
        pooled = jnp.maximum(pooled, rowp[:, di:di + H, :])
    # Keeping output rows/cols 0..H-1 / 0..W-1 reproduces PyTorch's behaviour
    # for both odd block_size (output == H) and even block_size (output is
    # H+1 and the reference crops the last row/col).

    block_mask = 1.0 - pooled                             # (N, H, W)

    # Fold numel / sum into the mask so the big kernel is one multiply/elem.
    total = jnp.sum(block_mask)
    numel = jnp.float32(block_mask.size)                  # static: N * H * W
    # NOTE: like the PyTorch reference, this is inf if every position is
    # covered by a block (total == 0); intentionally not guarded to keep
    # identical forward semantics.
    scale = numel / total
    out_ref[...] = block_mask * scale


def _apply_mask_kernel(mask_ref, x_ref, out_ref):
    """out = x * scaled_block_mask, broadcast over the channel tile.

    mask_ref : (1, 1, HW)   f32
    x_ref    : (1, Ct, HW)  x.dtype
    out_ref  : (1, Ct, HW)  x.dtype
    """
    out_ref[...] = (x_ref[...] * mask_ref[...]).astype(out_ref.dtype)


def _pick_channel_tile(C, HW, itemsize, budget_bytes=2 * 1024 * 1024):
    """Largest channel tile whose x block fits in a ~2 MiB VMEM budget."""
    if C * HW * itemsize <= budget_bytes:
        return C
    ct = max(8, (budget_bytes // (HW * itemsize)) // 8 * 8)  # multiple of 8
    return min(C, int(ct))


def dropblock2d(x, key, p, block_size=7, training=True):
    """JAX/Pallas equivalent of DropBlock2D.forward (NCHW input)."""
    assert x.ndim == 4, "Expected input with 4 dimensions (bsize, channels, height, width)"
    if (not training) or p == 0.0:
        return x

    N, C, H, W = x.shape
    gamma = p / (block_size ** 2)
    pad = block_size // 2

    # Bernoulli(gamma) seed mask per (N, H, W), shared across channels as in
    # the reference, zero-padded for the pool (seeds >= 0 so zero padding is
    # equivalent to -inf padding of max_pool2d).
    rand = jax.random.uniform(key, (N, H, W), dtype=jnp.float32)
    seeds = (rand < gamma).astype(jnp.float32)
    mask_pad = jnp.pad(seeds, ((0, 0), (pad, pad), (pad, pad)))
    Hp, Wp = H + 2 * pad, W + 2 * pad

    # --- Kernel 1: tiny mask kernel (separable pool + normalisation). -------
    mask_kernel = functools.partial(
        _block_mask_kernel, block_size=block_size, H=H, W=W)
    scaled_mask = pl.pallas_call(
        mask_kernel,
        out_shape=jax.ShapeDtypeStruct((N, H, W), jnp.float32),
        grid=(1,),
        in_specs=[pl.BlockSpec((N, Hp, Wp), lambda i: (0, 0, 0))],
        out_specs=pl.BlockSpec((N, H, W), lambda i: (0, 0, 0)),
    )(mask_pad)

    # --- Kernel 2: tiled, lane-dense, pipelined elementwise scaling. --------
    HW = H * W
    x2d = x.reshape(N, C, HW)                 # free reshape (contiguous dims)
    mask2d = scaled_mask.reshape(N, 1, HW)

    itemsize = jnp.dtype(x.dtype).itemsize
    ct = _pick_channel_tile(C, HW, itemsize)
    grid = (N, pl.cdiv(C, ct))

    bytes_accessed = 2 * N * C * HW * itemsize + N * HW * 4
    out2d = pl.pallas_call(
        _apply_mask_kernel,
        out_shape=jax.ShapeDtypeStruct((N, C, HW), x.dtype),
        grid=grid,
        in_specs=[
            pl.BlockSpec((1, 1, HW), lambda n, c: (n, 0, 0)),    # mask, reused over c
            pl.BlockSpec((1, ct, HW), lambda n, c: (n, c, 0)),   # x tile
        ],
        out_specs=pl.BlockSpec((1, ct, HW), lambda n, c: (n, c, 0)),
        compiler_params=pltpu.CompilerParams(
            dimension_semantics=("parallel", "parallel"),
            vmem_limit_bytes=32 * 1024 * 1024,
        ),
        cost_estimate=pl.CostEstimate(
            flops=N * C * HW,
            transcendentals=0,
            bytes_accessed=int(bytes_accessed),
        ),
    )(mask2d, x2d)

    return out2d.reshape(N, C, H, W)


def _ref_dropblock(x, seeds, block_size):
    """Pure-JAX reference mirroring the PyTorch module (for sanity check)."""
    N, C, H, W = x.shape
    pad = block_size // 2
    mp = jnp.pad(seeds, ((0, 0), (pad, pad), (pad, pad)))
    pooled = mp[:, 0:H, 0:W]
    for di in range(block_size):
        for dj in range(block_size):
            pooled = jnp.maximum(pooled, mp[:, di:di + H, dj:dj + W])
    bm = 1.0 - pooled
    return x * bm[:, None, :, :] * (bm.size / jnp.sum(bm))


if __name__ == "__main__":
    key = jax.random.PRNGKey(0)
    kx, kmask = jax.random.split(key)

    # Small shapes consistent with the module's (N, C, H, W) input.
    N, C, H, W = 2, 4, 16, 16
    p, block_size = 0.1, 7
    x = jax.random.normal(kx, (N, C, H, W), dtype=jnp.float32)

    out = dropblock2d(x, kmask, p=p, block_size=block_size, training=True)
    jax.block_until_ready(out)
    assert out.shape == x.shape and out.dtype == x.dtype

    # Sanity check against a pure-JAX reference using the same seed mask.
    gamma = p / (block_size ** 2)
    rand = jax.random.uniform(kmask, (N, H, W), dtype=jnp.float32)
    seeds = (rand < gamma).astype(jnp.float32)
    ref = _ref_dropblock(x, seeds, block_size)
    assert bool(jnp.allclose(out, ref, rtol=1e-5, atol=1e-6))

    print("KERNEL_OK")
</pallas_src>

<mosaic_0001>
module attributes {stable_mosaic.version = 11 : i64} {
  func.func @_block_mask_kernel(%arg0: i32, %arg1: memref<2x22x22xf32, #tpu.memory_space<vmem>>, %arg2: memref<2x16x16xf32, #tpu.memory_space<vmem>>) attributes {dimension_semantics = [#tpu.dimension_semantics<arbitrary>], iteration_bounds = array<i64: 1>, scalar_prefetch = 0 : i64, scratch_operands = 0 : i64, tpu.core_type = #tpu.core_type<tc>, window_params = [{pipeline_mode = #tpu.pipeline_mode<synchronous>, transform_indices = @transform_0, window_bounds = array<i64: 2, 22, 22>}, {pipeline_mode = #tpu.pipeline_mode<synchronous>, transform_indices = @transform_1, window_bounds = array<i64: 2, 16, 16>}]} {
    %c0 = arith.constant 0 : index
    %c0_0 = arith.constant 0 : index
    %c0_1 = arith.constant 0 : index
    %0 = vector.load %arg1[%c0, %c0_0, %c0_1] : memref<2x22x22xf32, #tpu.memory_space<vmem>>, vector<2x22x22xf32>
    %1 = vector.extract_strided_slice %0 {offsets = [0, 0, 0], sizes = [2, 22, 16], strides = [1, 1, 1]} : vector<2x22x22xf32> to vector<2x22x16xf32>
    %2 = vector.extract_strided_slice %0 {offsets = [0, 0, 1], sizes = [2, 22, 16], strides = [1, 1, 1]} : vector<2x22x22xf32> to vector<2x22x16xf32>
    %3 = arith.maximumf %1, %2 : vector<2x22x16xf32>
    %4 = vector.extract_strided_slice %0 {offsets = [0, 0, 2], sizes = [2, 22, 16], strides = [1, 1, 1]} : vector<2x22x22xf32> to vector<2x22x16xf32>
    %5 = arith.maximumf %3, %4 : vector<2x22x16xf32>
    %6 = vector.extract_strided_slice %0 {offsets = [0, 0, 3], sizes = [2, 22, 16], strides = [1, 1, 1]} : vector<2x22x22xf32> to vector<2x22x16xf32>
    %7 = arith.maximumf %5, %6 : vector<2x22x16xf32>
    %8 = vector.extract_strided_slice %0 {offsets = [0, 0, 4], sizes = [2, 22, 16], strides = [1, 1, 1]} : vector<2x22x22xf32> to vector<2x22x16xf32>
    %9 = arith.maximumf %7, %8 : vector<2x22x16xf32>
    %10 = vector.extract_strided_slice %0 {offsets = [0, 0, 5], sizes = [2, 22, 16], strides = [1, 1, 1]} : vector<2x22x22xf32> to vector<2x22x16xf32>
    %11 = arith.maximumf %9, %10 : vector<2x22x16xf32>
    %12 = vector.extract_strided_slice %0 {offsets = [0, 0, 6], sizes = [2, 22, 16], strides = [1, 1, 1]} : vector<2x22x22xf32> to vector<2x22x16xf32>
    %13 = arith.maximumf %11, %12 : vector<2x22x16xf32>
    %14 = vector.extract_strided_slice %13 {offsets = [0, 0, 0], sizes = [2, 16, 16], strides = [1, 1, 1]} : vector<2x22x16xf32> to vector<2x16x16xf32>
    %15 = vector.extract_strided_slice %13 {offsets = [0, 1, 0], sizes = [2, 16, 16], strides = [1, 1, 1]} : vector<2x22x16xf32> to vector<2x16x16xf32>
    %16 = arith.maximumf %14, %15 : vector<2x16x16xf32>
    %17 = vector.extract_strided_slice %13 {offsets = [0, 2, 0], sizes = [2, 16, 16], strides = [1, 1, 1]} : vector<2x22x16xf32> to vector<2x16x16xf32>
    %18 = arith.maximumf %16, %17 : vector<2x16x16xf32>
    %19 = vector.extract_strided_slice %13 {offsets = [0, 3, 0], sizes = [2, 16, 16], strides = [1, 1, 1]} : vector<2x22x16xf32> to vector<2x16x16xf32>
    %20 = arith.maximumf %18, %19 : vector<2x16x16xf32>
    %21 = vector.extract_strided_slice %13 {offsets = [0, 4, 0], sizes = [2, 16, 16], strides = [1, 1, 1]} : vector<2x22x16xf32> to vector<2x16x16xf32>
    %22 = arith.maximumf %20, %21 : vector<2x16x16xf32>
    %23 = vector.extract_strided_slice %13 {offsets = [0, 5, 0], sizes = [2, 16, 16], strides = [1, 1, 1]} : vector<2x22x16xf32> to vector<2x16x16xf32>
    %24 = arith.maximumf %22, %23 : vector<2x16x16xf32>
    %25 = vector.extract_strided_slice %13 {offsets = [0, 6, 0], sizes = [2, 16, 16], strides = [1, 1, 1]} : vector<2x22x16xf32> to vector<2x16x16xf32>
    %26 = arith.maximumf %24, %25 : vector<2x16x16xf32>
    %cst = arith.constant 1.000000e+00 : f32
    %27 = vector.broadcast %cst : f32 to vector<2x16x16xf32>
    %28 = arith.subf %27, %26 : vector<2x16x16xf32>
    %29 = vector.shape_cast %28 : vector<2x16x16xf32> to vector<1x2x16x16xf32>
    %cst_2 = arith.constant dense<0.000000e+00> : vector<1xf32>
    %30 = vector.multi_reduction <add>, %29, %cst_2 [1, 2, 3] : vector<1x2x16x16xf32> to vector<1xf32>
    %31 = vector.shape_cast %30 : vector<1xf32> to vector<1x1x1x1xf32>
    %32 = vector.extract %31[0, 0, 0, 0] : f32 from vector<1x1x1x1xf32>
    %cst_3 = arith.constant 5.120000e+02 : f32
    %33 = arith.divf %cst_3, %32 : f32
    %34 = vector.broadcast %33 : f32 to vector<2x16x16xf32>
    %35 = arith.mulf %28, %34 : vector<2x16x16xf32>
    %c0_4 = arith.constant 0 : index
    %c0_5 = arith.constant 0 : index
    %c0_6 = arith.constant 0 : index
    %36 = vector.load %arg2[%c0_4, %c0_5, %c0_6] : memref<2x16x16xf32, #tpu.memory_space<vmem>>, vector<2x16x16xf32>
    tpu.vector_store %arg2[%c0_4, %c0_5, %c0_6], %35 {strides = array<i32>} : memref<2x16x16xf32, #tpu.memory_space<vmem>>, vector<2x16x16xf32>,
    return
  }
  func.func @transform_0(%arg0: i32) -> (i32, i32, i32) {
    %c0_i32 = arith.constant 0 : i32
    %c0_i32_0 = arith.constant 0 : i32
    %c0_i32_1 = arith.constant 0 : i32
    %c0_i32_2 = arith.constant 0 : i32
    return %c0_i32, %c0_i32_0, %c0_i32_1 : i32, i32, i32
  }
  func.func @transform_1(%arg0: i32) -> (i32, i32, i32) {
    %c0_i32 = arith.constant 0 : i32
    %c0_i32_0 = arith.constant 0 : i32
    %c0_i32_1 = arith.constant 0 : i32
    %c0_i32_2 = arith.constant 0 : i32
    return %c0_i32, %c0_i32_0, %c0_i32_1 : i32, i32, i32
  }
}

</mosaic_0001>

<llo_original>
// kernel: tpu_custom_call.1
$region0: #{tpu_custom_call.1}
  #allocation0 [shape = 'u32[]', space=smem, size = 0x4, offset = 0x4, fixed_abs, tag = 'smem constant byte address 0x4 - core index']
  #allocation1 [shape = 'u32[144,128]{1,0:T(1,128)}', space=vmem, size = 0x12000, scoped, tag = 'internal scratch']
  %s0 = inlined_call_operand.vmem [shape: f32[2,22,22], index: 0, kind: input, shape index: {}]
  %s1 = inlined_call_operand.hbm [shape: f32[2,16,16], index: 1, kind: output, shape index: {}]
  %s2 = sld [smem:[#allocation0]]
  $region14: #{tpu_custom_call.1} parent=0
    _
  %s4 = ssub.s32 1, %s2
  %s5 = scalar_select 0, %s4, %s2
  $region1: #{tpu_custom_call.1} parent=0
    #allocation2 [shape = 'u8[16384]{0}', space=vmem, size = 0x4000, scoped, tag = 'output window, operand 0, single buffered']
    #allocation3 [shape = 's32[1]{0}', space=sflag, size = 0x4, scoped, tag = 'scoped memory for tpu_custom_call.1']
    %6 = vsyncpa [#allocation3], 0
    // Predicated region
    $region2: #{tpu_custom_call.1} parent=1 // pred_check
      _
    $region3: #{tpu_custom_call.1} parent=1 // pred_check_branch
      %8 = sbr.rel (0) target = $region5
    $region4: #{tpu_custom_call.1} parent=1 // pred_region
      _
    $region5: #{tpu_custom_call.1} parent=1 // pred_fallthru
      _
    %v9 = vld [vmem:[%s0] sm:$0xff]
    %v10 = vld [vmem:[%s0 + $0x8] sm:$0xff]
    %v11 = vld [vmem:[%s0 + $0x10] sm:$0x3f]
    %v12 = vld [vmem:[%s0 + $0x18] sm:$0xff]
    %v13 = vld [vmem:[%s0 + $0x20] sm:$0xff]
    %v14 = vld [vmem:[%s0 + $0x28] sm:$0x3f]
    %21 = vrot.lane.b32.xlu0 %v9, 127
    %v22 = vpop.permute.xlu0 %21
    %23 = vrot.lane.b32.xlu0 %v10, 127
    %v24 = vpop.permute.xlu0 %23
    %25 = vrot.lane.b32.xlu0 %v11, 127
    %v26 = vpop.permute.xlu0 %25
    %27 = vrot.lane.b32.xlu0 %v12, 127
    %v28 = vpop.permute.xlu0 %27
    %29 = vrot.lane.b32.xlu0 %v13, 127
    %v30 = vpop.permute.xlu0 %29
    %31 = vrot.lane.b32.xlu0 %v14, 127
    %v32 = vpop.permute.xlu0 %31
    %v39 = vmax.f32 %v9, %v22
    %v40 = vmax.f32 %v10, %v24
    %v41 = vmax.f32 %v11, %v26
    %v42 = vmax.f32 %v12, %v28
    %v43 = vmax.f32 %v13, %v30
    %v44 = vmax.f32 %v14, %v32
    %45 = vrot.lane.b32.xlu0 %v9, 126
    %v46 = vpop.permute.xlu0 %45
    %47 = vrot.lane.b32.xlu0 %v10, 126
    %v48 = vpop.permute.xlu0 %47
    %49 = vrot.lane.b32.xlu0 %v11, 126
    %v50 = vpop.permute.xlu0 %49
    %51 = vrot.lane.b32.xlu0 %v12, 126
    %v52 = vpop.permute.xlu0 %51
    %53 = vrot.lane.b32.xlu0 %v13, 126
    %v54 = vpop.permute.xlu0 %53
    %55 = vrot.lane.b32.xlu0 %v14, 126
    %v56 = vpop.permute.xlu0 %55
    %v63 = vmax.f32 %v39, %v46
    %v64 = vmax.f32 %v40, %v48
    %v65 = vmax.f32 %v41, %v50
    %v66 = vmax.f32 %v42, %v52
    %v67 = vmax.f32 %v43, %v54
    %v68 = vmax.f32 %v44, %v56
    %69 = vrot.lane.b32.xlu0 %v9, 125
    %v70 = vpop.permute.xlu0 %69
    %71 = vrot.lane.b32.xlu0 %v10, 125
    %v72 = vpop.permute.xlu0 %71
    %73 = vrot.lane.b32.xlu0 %v11, 125
    %v74 = vpop.permute.xlu0 %73
    %75 = vrot.lane.b32.xlu0 %v12, 125
    %v76 = vpop.permute.xlu0 %75
    %77 = vrot.lane.b32.xlu0 %v13, 125
    %v78 = vpop.permute.xlu0 %77
    %79 = vrot.lane.b32.xlu0 %v14, 125
    %v80 = vpop.permute.xlu0 %79
    %v87 = vmax.f32 %v63, %v70
    %v88 = vmax.f32 %v64, %v72
    %v89 = vmax.f32 %v65, %v74
    %v90 = vmax.f32 %v66, %v76
    %v91 = vmax.f32 %v67, %v78
    %v92 = vmax.f32 %v68, %v80
    %93 = vrot.lane.b32.xlu0 %v9, 124
    %v94 = vpop.permute.xlu0 %93
    %95 = vrot.lane.b32.xlu0 %v10, 124
    %v96 = vpop.permute.xlu0 %95
    %97 = vrot.lane.b32.xlu0 %v11, 124
    %v98 = vpop.permute.xlu0 %97
    %99 = vrot.lane.b32.xlu0 %v12, 124
    %v100 = vpop.permute.xlu0 %99
    %101 = vrot.lane.b32.xlu0 %v13, 124
    %v102 = vpop.permute.xlu0 %101
    %103 = vrot.lane.b32.xlu0 %v14, 124
    %v104 = vpop.permute.xlu0 %103
    %v111 = vmax.f32 %v87, %v94
    %v112 = vmax.f32 %v88, %v96
    %v113 = vmax.f32 %v89, %v98
    %v114 = vmax.f32 %v90, %v100
    %v115 = vmax.f32 %v91, %v102
    %v116 = vmax.f32 %v92, %v104
    %117 = vrot.lane.b32.xlu0 %v9, 123
    %v118 = vpop.permute.xlu0 %117
    %119 = vrot.lane.b32.xlu0 %v10, 123
    %v120 = vpop.permute.xlu0 %119
    %121 = vrot.lane.b32.xlu0 %v11, 123
    %v122 = vpop.permute.xlu0 %121
    %123 = vrot.lane.b32.xlu0 %v12, 123
    %v124 = vpop.permute.xlu0 %123
    %125 = vrot.lane.b32.xlu0 %v13, 123
    %v126 = vpop.permute.xlu0 %125
    %127 = vrot.lane.b32.xlu0 %v14, 123
    %v128 = vpop.permute.xlu0 %127
    %v135 = vmax.f32 %v111, %v118
    %v136 = vmax.f32 %v112, %v120
    %v137 = vmax.f32 %v113, %v122
    %v138 = vmax.f32 %v114, %v124
    %v139 = vmax.f32 %v115, %v126
    %v140 = vmax.f32 %v116, %v128
    %141 = vrot.lane.b32.xlu0 %v9, 122
    %v142 = vpop.permute.xlu0 %141
    %143 = vrot.lane.b32.xlu0 %v10, 122
    %v144 = vpop.permute.xlu0 %143
    %145 = vrot.lane.b32.xlu0 %v11, 122
    %v146 = vpop.permute.xlu0 %145
    %147 = vrot.lane.b32.xlu0 %v12, 122
    %v148 = vpop.permute.xlu0 %147
    %149 = vrot.lane.b32.xlu0 %v13, 122
    %v150 = vpop.permute.xlu0 %149
    %151 = vrot.lane.b32.xlu0 %v14, 122
    %v152 = vpop.permute.xlu0 %151
    %v159 = vmax.f32 %v135, %v142
    %v160 = vmax.f32 %v136, %v144
    %v161 = vmax.f32 %v137, %v146
    %v162 = vmax.f32 %v138, %v148
    %v163 = vmax.f32 %v139, %v150
    %v164 = vmax.f32 %v140, %v152
    %vm171 = vcmask 1046528
    %v172 = vrot.slane %v159, 1
    %v173 = vrot.slane %v160, 1
    %v174 = vsel %vm171, %v172, %v173
    %v175 = vrot.slane %v161, 1
    %v176 = vsel %vm171, %v173, %v175
    %v177 = vrot.slane %v162, 1
    %v178 = vrot.slane %v163, 1
    %v179 = vsel %vm171, %v177, %v178
    %v180 = vrot.slane %v164, 1
    %v181 = vsel %vm171, %v178, %v180
    %v186 = vmax.f32 %v159, %v174
    %v187 = vmax.f32 %v160, %v176
    %v188 = vmax.f32 %v162, %v179
    %v189 = vmax.f32 %v163, %v181
    %vm190 = vcmask 1045504
    %v191 = vrot.slane %v159, 2
    %v192 = vrot.slane %v160, 2
    %v193 = vsel %vm190, %v191, %v192
    %v194 = vrot.slane %v161, 2
    %v195 = vsel %vm190, %v192, %v194
    %v196 = vrot.slane %v162, 2
    %v197 = vrot.slane %v163, 2
    %v198 = vsel %vm190, %v196, %v197
    %v199 = vrot.slane %v164, 2
    %v200 = vsel %vm190, %v197, %v199
    %v205 = vmax.f32 %v186, %v193
    %v206 = vmax.f32 %v187, %v195
    %v207 = vmax.f32 %v188, %v198
    %v208 = vmax.f32 %v189, %v200
    %vm209 = vcmask 1044480
    %v210 = vrot.slane %v159, 3
    %v211 = vrot.slane %v160, 3
    %v212 = vsel %vm209, %v210, %v211
    %v213 = vrot.slane %v161, 3
    %v214 = vsel %vm209, %v211, %v213
    %v215 = vrot.slane %v162, 3
    %v216 = vrot.slane %v163, 3
    %v217 = vsel %vm209, %v215, %v216
    %v218 = vrot.slane %v164, 3
    %v219 = vsel %vm209, %v216, %v218
    %v224 = vmax.f32 %v205, %v212
    %v225 = vmax.f32 %v206, %v214
    %v226 = vmax.f32 %v207, %v217
    %v227 = vmax.f32 %v208, %v219
    %vm228 = vcmask 1043456
    %v229 = vrot.slane %v159, 4
    %v230 = vrot.slane %v160, 4
    %v231 = vsel %vm228, %v229, %v230
    %v232 = vrot.slane %v161, 4
    %v233 = vsel %vm228, %v230, %v232
    %v234 = vrot.slane %v162, 4
    %v235 = vrot.slane %v163, 4
    %v236 = vsel %vm228, %v234, %v235
    %v237 = vrot.slane %v164, 4
    %v238 = vsel %vm228, %v235, %v237
    %v243 = vmax.f32 %v224, %v231
    %v244 = vmax.f32 %v225, %v233
    %v245 = vmax.f32 %v226, %v236
    %v246 = vmax.f32 %v227, %v238
    %vm247 = vcmask 1042432
    %v248 = vrot.slane %v159, 5
    %v249 = vrot.slane %v160, 5
    %v250 = vsel %vm247, %v248, %v249
    %v251 = vrot.slane %v161, 5
    %v252 = vsel %vm247, %v249, %v251
    %v253 = vrot.slane %v162, 5
    %v254 = vrot.slane %v163, 5
    %v255 = vsel %vm247, %v253, %v254
    %v256 = vrot.slane %v164, 5
    %v257 = vsel %vm247, %v254, %v256
    %v262 = vmax.f32 %v243, %v250
    %v263 = vmax.f32 %v244, %v252
    %v264 = vmax.f32 %v245, %v255
    %v265 = vmax.f32 %v246, %v257
    %vm266 = vcmask 1041408
    %v267 = vrot.slane %v159, 6
    %v268 = vrot.slane %v160, 6
    %v269 = vsel %vm266, %v267, %v268
    %v270 = vrot.slane %v161, 6
    %v271 = vsel %vm266, %v268, %v270
    %v272 = vrot.slane %v162, 6
    %v273 = vrot.slane %v163, 6
    %v274 = vsel %vm266, %v272, %v273
    %v275 = vrot.slane %v164, 6
    %v276 = vsel %vm266, %v273, %v275
    %v281 = vmax.f32 %v262, %v269
    %v282 = vmax.f32 %v263, %v271
    %v283 = vmax.f32 %v264, %v274
    %v284 = vmax.f32 %v265, %v276
    %v285 = vsub.f32 1.0, %v281
    %v286 = vsub.f32 1.0, %v282
    %v287 = vsub.f32 1.0, %v283
    %v288 = vsub.f32 1.0, %v284
    %vm289 = vcmask 130048
    %v290 = vsel %vm289, %v285, 0.0
    %v291 = vsel %vm289, %v286, 0.0
    %v292 = vadd.f32 %v290, %v291
    %v293 = vsel %vm289, %v287, 0.0
    %v294 = vadd.f32 %v292, %v293
    %v295 = vsel %vm289, %v288, 0.0
    %v296 = vadd.f32 %v294, %v295
    %297 = vadd.xlane.f32.xlu0 %v296
    %v298 = vpop.xlane.xlu0 %297
    %v299 = vrot.slane %v298, 4
    %v300 = vadd.f32 %v298, %v299
    %v301 = vrot.slane %v300, 2
    %v302 = vadd.f32 %v300, %v301
    %v303 = vrot.slane %v302, 1
    %v304 = vadd.f32 %v302, %v303
    %s305 = vtos %v304
    %v306 = vstv %s305
    %v307 = vrcp.pop %v306
    %s308 = vtos %v307
    %s309 = smul.f32 512.0, %s308
    %v310 = vstv %s309
    %v311 = vmul.f32 %v285, %v310
    %v312 = vmul.f32 %v286, %v310
    %v313 = vmul.f32 %v287, %v310
    %v314 = vmul.f32 %v288, %v310
    %315 = vst.msk [vmem:[#allocation2] sm:$0xff] %vm289, %v311
    %316 = vst.msk [vmem:[#allocation2 + $0x8] sm:$0xff] %vm289, %v312
    %317 = vst.msk [vmem:[#allocation2 + $0x10] sm:$0xff] %vm289, %v313
    %318 = vst.msk [vmem:[#allocation2 + $0x18] sm:$0xff] %vm289, %v314
    // Predicated region
    $region6: #{tpu_custom_call.1} parent=1 // pred_check
      _
    $region7: #{tpu_custom_call.1} parent=1 // pred_check_branch
      %320 = sbr.rel (0) target = $region9
    $region8: #{tpu_custom_call.1} parent=1 // pred_region
      %s322 = ssub.s32 512, 512
      %323 = vsyncadd [#allocation3], %s322
      %s324 = sshll.u32 [#allocation2], 4
      %s325 = int_to_ptr.vmem [resolvable:$true] %s324
      %330 = dma.vmem_to_hbm [thread:$0]  %s325, 512, %s1, [#allocation3], 128, 128, 8
    $region9: #{tpu_custom_call.1} parent=1 // pred_fallthru
      _
    // Predicated region
    $region10: #{tpu_custom_call.1} parent=1 // pred_check
      _
    $region11: #{tpu_custom_call.1} parent=1 // pred_check_branch
      %332 = sbr.rel (0) target = $region13
    $region12: #{tpu_custom_call.1} parent=1 // pred_region
      %333 = dma.done [#allocation3], 512
    $region13: #{tpu_custom_call.1} parent=1 // pred_fallthru
      _
    %334 = vsyncpa [#allocation3], 1

</llo_original>
